<compile_context>
chip_gen: v7x
topology: tpu7x:2x2x1
jax: 0.10.0
libtpu: 0.0.40
codegen_flags: <defaults>
</compile_context>

<pallas_src>
import functools

import jax
import jax.numpy as jnp
from jax import lax
from jax.experimental import pallas as pl
from jax.experimental.pallas import tpu as pltpu
import numpy as np


def _focal_partial_kernel(n_ref, logits_ref, targets_ref, alpha_ref,
                          out_alpha_ref, out_focal_ref, *, gamma):
    x = logits_ref[...]                  # (TILE_N, C_pad) f32
    t = targets_ref[...]                 # (TILE_N, 1)     i32
    a = alpha_ref[...]                   # (1, C_pad)      f32
    tile_n, c_pad = x.shape

    # One-hot selection mask (scatter_ equivalent), built from a lane iota.
    col = lax.broadcasted_iota(jnp.int32, (tile_n, c_pad), 1)
    is_t = col == t                      # (TILE_N, C_pad) bool

    # Stable log-softmax pieces (no probs = e / s materialisation, no divide).
    m = jnp.max(x, axis=1, keepdims=True)            # (TILE_N, 1)
    e = jnp.exp(x - m)                                # (TILE_N, C_pad)
    s = jnp.sum(e, axis=1, keepdims=True)             # (TILE_N, 1)

    x_t = jnp.sum(jnp.where(is_t, x, 0.0), axis=1, keepdims=True)       # (TILE_N, 1)
    alpha_t = jnp.sum(jnp.where(is_t, a, 0.0), axis=1, keepdims=True)   # (TILE_N, 1)

    log_p = x_t - m - jnp.log(s)         # log p(x)[class], finite even for tiny p
    p_t = jnp.exp(log_p)                 # p(x)[class]
    one_minus = 1.0 - p_t

    # (1 - p)^gamma: integer gamma -> plain VPU multiplies, no transcendentals.
    if float(gamma) == int(gamma):
        g = int(gamma)
        pow_term = jnp.ones_like(one_minus)
        for _ in range(g):
            pow_term = pow_term * one_minus
    else:
        pow_term = one_minus ** jnp.float32(gamma)

    focal = -pow_term * log_p            # (TILE_N, 1)

    # Mask out padded rows of the (possibly ragged) last tile.
    row = (pl.program_id(0) * tile_n
           + lax.broadcasted_iota(jnp.int32, (tile_n, 1), 0))
    valid = (row < n_ref[0]).astype(x.dtype)

    sum_alpha = jnp.sum(alpha_t * valid)
    sum_focal = jnp.sum(focal * valid)

    # Lane-dense (unmasked) stores of the per-tile partial sums.
    out_alpha_ref[...] = jnp.full(out_alpha_ref.shape, sum_alpha, out_alpha_ref.dtype)
    out_focal_ref[...] = jnp.full(out_focal_ref.shape, sum_focal, out_focal_ref.dtype)


def focal_loss(logits, targets, alpha=None, gamma=2, size_average=True,
               tile_n=None):
    """Pallas TPU implementation of FocalLoss.forward."""
    logits = jnp.asarray(logits, jnp.float32)
    n, c = logits.shape
    targets = jnp.asarray(targets, jnp.int32).reshape(n)

    if alpha is None:
        alpha_vec = jnp.ones((c,), jnp.float32)      # torch.ones(class_num, 1)
    else:
        alpha_vec = jnp.asarray(alpha, jnp.float32).reshape(c)

    # --- layout: class axis lane-dense (multiple of 128) -------------------
    c_pad = max(128, ((c + 127) // 128) * 128)

    # --- tile size: biggest row tile whose double-buffered logits block stays
    # well inside the smallest scoped-VMEM default (v7x: 32 MiB of 64 MiB). ---
    if tile_n is None:
        budget = 6 * 1024 * 1024                     # bytes for 2x logits tile
        tile_n = budget // (2 * c_pad * 4)
        tile_n = max(8, min(1024, (tile_n // 8) * 8))
        tile_n = min(tile_n, ((n + 7) // 8) * 8)
    tile_n = max(8, (int(tile_n) // 8) * 8)

    num_tiles = int(pl.cdiv(n, tile_n))
    n_pad = num_tiles * tile_n

    # Pad class axis: logits with a huge negative (exp -> 0), alpha with 0.
    logits_p = jnp.pad(logits, ((0, 0), (0, c_pad - c)), constant_values=-1e30)
    # Pad row axis: padded rows are masked out inside the kernel.
    logits_p = jnp.pad(logits_p, ((0, n_pad - n), (0, 0)))
    targets_p = jnp.pad(targets, (0, n_pad - n)).reshape(n_pad, 1)
    alpha_p = jnp.pad(alpha_vec, (0, c_pad - c)).reshape(1, c_pad)
    n_true = jnp.array([n], jnp.int32)               # scalar prefetch (SMEM)

    kernel = functools.partial(_focal_partial_kernel, gamma=gamma)

    cost = pl.CostEstimate(
        flops=6 * n_pad * c_pad,
        transcendentals=n_pad * c_pad + 3 * n_pad,
        bytes_accessed=4 * n_pad * c_pad + 4 * n_pad + 4 * c_pad
                       + 2 * num_tiles * 8 * 128 * 4,
    )

    grid_spec = pltpu.PrefetchScalarGridSpec(
        num_scalar_prefetch=1,
        grid=(num_tiles,),
        in_specs=[
            pl.BlockSpec((tile_n, c_pad), lambda i, n_ref: (i, 0)),   # logits
            pl.BlockSpec((tile_n, 1), lambda i, n_ref: (i, 0)),       # targets
            pl.BlockSpec((1, c_pad), lambda i, n_ref: (0, 0)),        # alpha
        ],
        out_specs=[
            pl.BlockSpec((1, 8, 128), lambda i, n_ref: (i, 0, 0)),    # sum_alpha
            pl.BlockSpec((1, 8, 128), lambda i, n_ref: (i, 0, 0)),    # sum_focal
        ],
    )

    out_alpha, out_focal = pl.pallas_call(
        kernel,
        grid_spec=grid_spec,
        out_shape=(
            jax.ShapeDtypeStruct((num_tiles, 8, 128), jnp.float32),
            jax.ShapeDtypeStruct((num_tiles, 8, 128), jnp.float32),
        ),
        compiler_params=pltpu.CompilerParams(
            dimension_semantics=("parallel",)),       # no resident accumulator
        cost_estimate=cost,
    )(n_true, logits_p, targets_p, alpha_p)

    sum_alpha = jnp.sum(out_alpha[:, 0, 0])
    sum_focal = jnp.sum(out_focal[:, 0, 0])

    # batch_loss[i, j] = alpha_i * focal_j  (PyTorch (N, N) broadcast), reduced:
    loss = sum_alpha * sum_focal
    if size_average:
        loss = loss / jnp.float32(n * n)
    return loss


def _reference_focal_loss(logits, targets, alpha, gamma=2, size_average=True):
    """Pure-JAX re-implementation of the exact PyTorch forward (incl. broadcast)."""
    n, c = logits.shape
    p = jax.nn.softmax(logits, axis=1)
    mask = jax.nn.one_hot(targets, c, dtype=logits.dtype)
    probas = jnp.sum(p * mask, axis=1)                       # (N,)
    log_p = jnp.log(probas)
    alpha_g = jnp.asarray(alpha, jnp.float32).reshape(c, 1)[targets]   # (N, 1)
    batch_loss = -alpha_g * ((1.0 - probas) ** gamma) * log_p          # (N, N)
    return jnp.mean(batch_loss) if size_average else jnp.sum(batch_loss)


if __name__ == "__main__":
    key = jax.random.PRNGKey(0)
    k1, k2, k3 = jax.random.split(key, 3)

    # Case 1: multi-tile grid with a ragged last tile (N not a multiple of tile_n),
    # per-class alpha weights, mean reduction.
    N, C = 200, 16
    logits = jax.random.normal(k1, (N, C), dtype=jnp.float32) * 3.0
    targets = jax.random.randint(k2, (N,), 0, C, dtype=jnp.int32)
    alpha = jax.random.uniform(k3, (C, 1), dtype=jnp.float32) + 0.5

    loss = focal_loss(logits, targets, alpha=alpha, gamma=2,
                      size_average=True, tile_n=64)
    loss = jax.block_until_ready(loss)
    ref = _reference_focal_loss(logits, targets, alpha, gamma=2, size_average=True)
    np.testing.assert_allclose(np.asarray(loss), np.asarray(ref),
                               rtol=1e-4, atol=1e-5)

    # Case 2: default tile selection, alpha=None path, sum reduction.
    N2, C2 = 13, 10
    logits2 = jax.random.normal(k1, (N2, C2), dtype=jnp.float32)
    targets2 = jax.random.randint(k2, (N2,), 0, C2, dtype=jnp.int32)
    loss2 = focal_loss(logits2, targets2, alpha=None, gamma=2, size_average=False)
    loss2 = jax.block_until_ready(loss2)
    ref2 = _reference_focal_loss(logits2, targets2,
                                 jnp.ones((C2, 1), jnp.float32),
                                 gamma=2, size_average=False)
    np.testing.assert_allclose(np.asarray(loss2), np.asarray(ref2),
                               rtol=1e-4, atol=1e-5)

    print("KERNEL_OK")
</pallas_src>

<mosaic_0001>
module attributes {stable_mosaic.version = 11 : i64} {
  func.func @_focal_partial_kernel(%arg0: i32, %arg1: memref<1xi32, #tpu.memory_space<smem>>, %arg2: memref<64x128xf32, #tpu.memory_space<vmem>>, %arg3: memref<64x1xi32, #tpu.memory_space<vmem>>, %arg4: memref<1x128xf32, #tpu.memory_space<vmem>>, %arg5: memref<1x8x128xf32, #tpu.memory_space<vmem>>, %arg6: memref<1x8x128xf32, #tpu.memory_space<vmem>>) attributes {dimension_semantics = [#tpu.dimension_semantics<parallel>], iteration_bounds = array<i64: 4>, scalar_prefetch = 1 : i64, scratch_operands = 0 : i64, tpu.core_type = #tpu.core_type<tc>, window_params = [{transform_indices = @transform_0, window_bounds = array<i64: 64, 128>}, {transform_indices = @transform_1, window_bounds = array<i64: 64, 1>}, {pipeline_mode = #tpu.pipeline_mode<synchronous>, transform_indices = @transform_2, window_bounds = array<i64: 1, 128>}, {transform_indices = @transform_3, window_bounds = array<i64: 1, 8, 128>}, {transform_indices = @transform_4, window_bounds = array<i64: 1, 8, 128>}]} {
    %c0 = arith.constant 0 : index
    %c0_0 = arith.constant 0 : index
    %0 = vector.load %arg2[%c0, %c0_0] : memref<64x128xf32, #tpu.memory_space<vmem>>, vector<64x128xf32>
    %c0_1 = arith.constant 0 : index
    %c0_2 = arith.constant 0 : index
    %1 = vector.load %arg3[%c0_1, %c0_2] : memref<64x1xi32, #tpu.memory_space<vmem>>, vector<64x1xi32>
    %c0_3 = arith.constant 0 : index
    %c0_4 = arith.constant 0 : index
    %2 = vector.load %arg4[%c0_3, %c0_4] : memref<1x128xf32, #tpu.memory_space<vmem>>, vector<1x128xf32>
    %3 = tpu.iota {dimensions = array<i32: 1>} : vector<64x128xi32>
    %4 = vector.broadcast %1 : vector<64x1xi32> to vector<64x128xi32>
    %5 = arith.cmpi eq, %3, %4 : vector<64x128xi32>
    %cst = arith.constant dense<0xFF800000> : vector<64xf32>
    %6 = vector.multi_reduction <maximumf>, %0, %cst [1] : vector<64x128xf32> to vector<64xf32>
    %7 = vector.shape_cast %6 : vector<64xf32> to vector<64x1xf32>
    %8 = vector.broadcast %7 : vector<64x1xf32> to vector<64x128xf32>
    %9 = arith.subf %0, %8 : vector<64x128xf32>
    %10 = math.exp %9 : vector<64x128xf32>
    %cst_5 = arith.constant dense<0.000000e+00> : vector<64xf32>
    %11 = vector.multi_reduction <add>, %10, %cst_5 [1] : vector<64x128xf32> to vector<64xf32>
    %12 = vector.shape_cast %11 : vector<64xf32> to vector<64x1xf32>
    %cst_6 = arith.constant 0.000000e+00 : f32
    %13 = vector.broadcast %cst_6 : f32 to vector<64x128xf32>
    %14 = arith.select %5, %0, %13 : vector<64x128xi1>, vector<64x128xf32>
    %cst_7 = arith.constant dense<0.000000e+00> : vector<64xf32>
    %15 = vector.multi_reduction <add>, %14, %cst_7 [1] : vector<64x128xf32> to vector<64xf32>
    %16 = vector.shape_cast %15 : vector<64xf32> to vector<64x1xf32>
    %cst_8 = arith.constant 0.000000e+00 : f32
    %17 = vector.shape_cast %2 : vector<1x128xf32> to vector<1x128xf32>
    %18 = vector.broadcast %17 : vector<1x128xf32> to vector<64x128xf32>
    %19 = vector.broadcast %cst_8 : f32 to vector<64x128xf32>
    %20 = arith.select %5, %18, %19 : vector<64x128xi1>, vector<64x128xf32>
    %cst_9 = arith.constant dense<0.000000e+00> : vector<64xf32>
    %21 = vector.multi_reduction <add>, %20, %cst_9 [1] : vector<64x128xf32> to vector<64xf32>
    %22 = vector.shape_cast %21 : vector<64xf32> to vector<64x1xf32>
    %23 = arith.subf %16, %7 : vector<64x1xf32>
    %24 = math.log %12 : vector<64x1xf32>
    %25 = arith.subf %23, %24 : vector<64x1xf32>
    %26 = math.exp %25 : vector<64x1xf32>
    %cst_10 = arith.constant 1.000000e+00 : f32
    %27 = vector.broadcast %cst_10 : f32 to vector<64x1xf32>
    %28 = arith.subf %27, %26 : vector<64x1xf32>
    %cst_11 = arith.constant 1.000000e+00 : f32
    %29 = vector.broadcast %cst_11 : f32 to vector<64x1xf32>
    %30 = arith.mulf %29, %28 : vector<64x1xf32>
    %31 = arith.mulf %30, %28 : vector<64x1xf32>
    %cst_12 = arith.constant 0.000000e+00 : f32
    %32 = vector.broadcast %cst_12 : f32 to vector<64x1xf32>
    %33 = arith.subf %32, %31 : vector<64x1xf32>
    %34 = arith.mulf %33, %25 : vector<64x1xf32>
    %c64_i32 = arith.constant 64 : i32
    %35 = arith.muli %arg0, %c64_i32 : i32
    %36 = tpu.iota {dimensions = array<i32: 0>} : vector<64x1xi32>
    %37 = vector.broadcast %35 : i32 to vector<64x1xi32>
    %38 = arith.addi %37, %36 : vector<64x1xi32>
    %c0_13 = arith.constant 0 : index
    %39 = memref.load %arg1[%c0_13] : memref<1xi32, #tpu.memory_space<smem>>
    %40 = vector.broadcast %39 : i32 to vector<64x1xi32>
    %41 = arith.cmpi slt, %38, %40 : vector<64x1xi32>
    %42 = arith.extui %41 : vector<64x1xi1> to vector<64x1xi32>
    %43 = arith.sitofp %42 : vector<64x1xi32> to vector<64x1xf32>
    %44 = arith.mulf %22, %43 : vector<64x1xf32>
    %45 = vector.shape_cast %44 : vector<64x1xf32> to vector<1x64x1xf32>
    %cst_14 = arith.constant dense<0.000000e+00> : vector<1xf32>
    %46 = vector.multi_reduction <add>, %45, %cst_14 [1, 2] : vector<1x64x1xf32> to vector<1xf32>
    %47 = vector.shape_cast %46 : vector<1xf32> to vector<1x1x1xf32>
    %48 = vector.extract %47[0, 0, 0] : f32 from vector<1x1x1xf32>
    %49 = arith.mulf %34, %43 : vector<64x1xf32>
    %50 = vector.shape_cast %49 : vector<64x1xf32> to vector<1x64x1xf32>
    %cst_15 = arith.constant dense<0.000000e+00> : vector<1xf32>
    %51 = vector.multi_reduction <add>, %50, %cst_15 [1, 2] : vector<1x64x1xf32> to vector<1xf32>
    %52 = vector.shape_cast %51 : vector<1xf32> to vector<1x1x1xf32>
    %53 = vector.extract %52[0, 0, 0] : f32 from vector<1x1x1xf32>
    %54 = vector.broadcast %48 : f32 to vector<1x8x128xf32>
    %c0_16 = arith.constant 0 : index
    %c0_17 = arith.constant 0 : index
    %c0_18 = arith.constant 0 : index
    %55 = vector.load %arg5[%c0_16, %c0_17, %c0_18] : memref<1x8x128xf32, #tpu.memory_space<vmem>>, vector<1x8x128xf32>
    tpu.vector_store %arg5[%c0_16, %c0_17, %c0_18], %54 {strides = array<i32>} : memref<1x8x128xf32, #tpu.memory_space<vmem>>, vector<1x8x128xf32>,
    %56 = vector.broadcast %53 : f32 to vector<1x8x128xf32>
    %c0_19 = arith.constant 0 : index
    %c0_20 = arith.constant 0 : index
    %c0_21 = arith.constant 0 : index
    %57 = vector.load %arg6[%c0_19, %c0_20, %c0_21] : memref<1x8x128xf32, #tpu.memory_space<vmem>>, vector<1x8x128xf32>
    tpu.vector_store %arg6[%c0_19, %c0_20, %c0_21], %56 {strides = array<i32>} : memref<1x8x128xf32, #tpu.memory_space<vmem>>, vector<1x8x128xf32>,
    return
  }
  func.func @transform_0(%arg0: i32, %arg1: memref<1xi32, #tpu.memory_space<smem>>) -> (i32, i32) {
    %c0_i32 = arith.constant 0 : i32
    %c0_i32_0 = arith.constant 0 : i32
    return %arg0, %c0_i32 : i32, i32
  }
  func.func @transform_1(%arg0: i32, %arg1: memref<1xi32, #tpu.memory_space<smem>>) -> (i32, i32) {
    %c0_i32 = arith.constant 0 : i32
    %c0_i32_0 = arith.constant 0 : i32
    return %arg0, %c0_i32 : i32, i32
  }
  func.func @transform_2(%arg0: i32, %arg1: memref<1xi32, #tpu.memory_space<smem>>) -> (i32, i32) {
    %c0_i32 = arith.constant 0 : i32
    %c0_i32_0 = arith.constant 0 : i32
    %c0_i32_1 = arith.constant 0 : i32
    return %c0_i32, %c0_i32_0 : i32, i32
  }
  func.func @transform_3(%arg0: i32, %arg1: memref<1xi32, #tpu.memory_space<smem>>) -> (i32, i32, i32) {
    %c0_i32 = arith.constant 0 : i32
    %c0_i32_0 = arith.constant 0 : i32
    %c0_i32_1 = arith.constant 0 : i32
    return %arg0, %c0_i32, %c0_i32_0 : i32, i32, i32
  }
  func.func @transform_4(%arg0: i32, %arg1: memref<1xi32, #tpu.memory_space<smem>>) -> (i32, i32, i32) {
    %c0_i32 = arith.constant 0 : i32
    %c0_i32_0 = arith.constant 0 : i32
    %c0_i32_1 = arith.constant 0 : i32
    return %arg0, %c0_i32, %c0_i32_0 : i32, i32, i32
  }
}

</mosaic_0001>

<llo_original>
// kernel: tpu_custom_call.1
$region0: #{tpu_custom_call.1}
  #allocation0 [shape = 'u32[]', space=smem, size = 0x4, offset = 0x4, fixed_abs, tag = 'smem constant byte address 0x4 - core index']
  #allocation1 [shape = 'u32[144,128]{1,0:T(1,128)}', space=vmem, size = 0x12000, scoped, tag = 'internal scratch']
  #allocation2 [shape = 's32[1]{0}', space=sflag, size = 0x4, scoped, tag = 'scoped memory for tpu_custom_call.1']
  #allocation3 [shape = 's32[1]{0:T(128)S(6)}', space=smem, size = 0x200, scoped, tag = 'prefetched SMEM operand 0']
  %s0 = inlined_call_operand.<no memory space> [shape: s32[1], index: 0, kind: input, shape index: {}]
  %s1 = inlined_call_operand.vmem [shape: f32[256,128], index: 1, kind: input, shape index: {}]
  %s2 = inlined_call_operand.vmem [shape: s32[256,1], index: 2, kind: input, shape index: {}]
  %s3 = inlined_call_operand.vmem [shape: f32[1,128], index: 3, kind: input, shape index: {}]
  %s4 = inlined_call_operand.hbm [shape: f32[4,8,128], index: 4, kind: output, shape index: {0}]
  %s5 = inlined_call_operand.hbm [shape: f32[4,8,128], index: 5, kind: output, shape index: {1}]
  %6 = xla_tuple %s4, %s5
  %s7 = sld [smem:[#allocation0]]
  $region53: #{tpu_custom_call.1} parent=0
    _
  %s9 = ssub.s32 1, %s7
  %s10 = scalar_select 0, %s9, %s7
  %11 = sst [smem:[#allocation3]] %s0
  $region1: #{tpu_custom_call.1} parent=0
    #allocation4 [shape = 'u8[8192]{0}', space=vmem, size = 0x2000, scoped, tag = 'output window, operand 0']
    #allocation5 [shape = 's32[2]{0}', space=sflag, size = 0x8, scoped, tag = 'scoped memory for tpu_custom_call.1']
    #allocation6 [shape = 'u8[8192]{0}', space=vmem, size = 0x2000, scoped, tag = 'output window, operand 1']
    #allocation7 [shape = 's32[2]{0}', space=sflag, size = 0x8, scoped, tag = 'scoped memory for tpu_custom_call.1']
    %12 = vsyncpa [#allocation5], 0
    %s13 = scalar_lea.sflag [#allocation5], 1
    %14 = vsyncpa %s13, 0
    %15 = vsyncpa [#allocation7], 0
    %s16 = scalar_lea.sflag [#allocation7], 1
    %17 = vsyncpa %s16, 0
    loop: start=0, step=1, limit=6
    $region2: #{tpu_custom_call.1} parent=1 // loop_pre_header
      _
    $region3: #{tpu_custom_call.1} parent=1 // loop_header
      %s19 = sphi 0, %s23
      %p20 = scmp.ge.s32.totalorder %s19, 6
      %s29 = sphi 0, %s31
      %s32 = sphi 0, %s29
      %s33 = sphi 0, %s32
      %s49 = sphi 0, %s33
      %s55 = sphi 0, %s57
      %s58 = sphi 0, %s55
      %s59 = sphi 0, %s58
      %s75 = sphi 0, %s59
      %s79 = sphi 0, %s79
      %s81 = sphi 0, %s79
      %s82 = sphi 0, %s81
      %s96 = sphi 0, %s82
      %s102 = sphi 0, %s104
      %s105 = sphi 0, %s102
      %s106 = sphi 0, %s105
      %s122 = sphi 0, %s106
      %s128 = sphi 0, %s130
      %s131 = sphi 0, %s128
      %s132 = sphi 0, %s131
      %s148 = sphi 0, %s132
    $region4: #{tpu_custom_call.1} parent=1 // loop_header_branch
      %22 = sbr.rel (%p20) target = $region8
    $region5: #{tpu_custom_call.1} parent=1 // loop_body
      %s24 = ssub.s32 %s19, 1
      %s25 = ssub.s32 %s19, 2
      %s26 = sadd.s32 %s19, 1
      %s27 = ssub.s32 %s19, %s26
      %p28 = scmp.eq.s32.totalorder %s27, 0
      %s30 = sadd.s32 %s29, 1
      %s31 = scalar_select %p28, %s29, %s30
      %p34 = pneg %p28
      %p35 = scmp.eq.s32.totalorder %s19, 3
      %p36 = por %p34, %p35
      %p37 = scmp.ne.s32.totalorder %s29, %s32
      %p38 = scmp.eq.s32.totalorder %s19, 0
      %p39 = por %p37, %p38
      %p40 = scmp.ne.s32.totalorder %s29, %s32
      %p41 = scmp.eq.s32.totalorder %s24, 3
      %p42 = por %p40, %p41
      %p43 = scmp.ne.s32.totalorder %s32, %s33
      %p44 = scmp.eq.s32.totalorder %s24, 0
      %p45 = por %p43, %p44
      %p46 = scmp.ne.s32.totalorder %s32, %s33
      %p47 = scmp.eq.s32.totalorder %s25, 3
      %p48 = por %p46, %p47
      %p50 = scmp.ne.s32.totalorder %s33, %s49
      %p51 = scmp.eq.s32.totalorder %s25, 0
      %p52 = por %p50, %p51
      %s53 = ssub.s32 %s19, %s26
      %p54 = scmp.eq.s32.totalorder %s53, 0
      %s56 = sadd.s32 %s55, 1
      %s57 = scalar_select %p54, %s55, %s56
      %p60 = pneg %p54
      %p61 = scmp.eq.s32.totalorder %s19, 3
      %p62 = por %p60, %p61
      %p63 = scmp.ne.s32.totalorder %s55, %s58
      %p64 = scmp.eq.s32.totalorder %s19, 0
      %p65 = por %p63, %p64
      %p66 = scmp.ne.s32.totalorder %s55, %s58
      %p67 = scmp.eq.s32.totalorder %s24, 3
      %p68 = por %p66, %p67
      %p69 = scmp.ne.s32.totalorder %s58, %s59
      %p70 = scmp.eq.s32.totalorder %s24, 0
      %p71 = por %p69, %p70
      %p72 = scmp.ne.s32.totalorder %s58, %s59
      %p73 = scmp.eq.s32.totalorder %s25, 3
      %p74 = por %p72, %p73
      %p76 = scmp.ne.s32.totalorder %s59, %s75
      %p77 = scmp.eq.s32.totalorder %s25, 0
      %p78 = por %p76, %p77
      %s80 = sadd.s32 %s79, 1
      %p83 = scmp.eq.s32.totalorder %s19, 3
      %p84 = scmp.ne.s32.totalorder %s79, %s81
      %p85 = scmp.eq.s32.totalorder %s19, 0
      %p86 = por %p84, %p85
      %p87 = scmp.ne.s32.totalorder %s79, %s81
      %p88 = scmp.eq.s32.totalorder %s24, 3
      %p89 = por %p87, %p88
      %p90 = scmp.ne.s32.totalorder %s81, %s82
      %p91 = scmp.eq.s32.totalorder %s24, 0
      %p92 = por %p90, %p91
      %p93 = scmp.ne.s32.totalorder %s81, %s82
      %p94 = scmp.eq.s32.totalorder %s25, 3
      %p95 = por %p93, %p94
      %p97 = scmp.ne.s32.totalorder %s82, %s96
      %p98 = scmp.eq.s32.totalorder %s25, 0
      %p99 = por %p97, %p98
      %s100 = ssub.s32 %s19, %s26
      %p101 = scmp.eq.s32.totalorder %s100, 0
      %s103 = sadd.s32 %s102, 1
      %s104 = scalar_select %p101, %s102, %s103
      %p107 = pneg %p101
      %p108 = scmp.eq.s32.totalorder %s19, 3
      %p109 = por %p107, %p108
      %p110 = scmp.ne.s32.totalorder %s102, %s105
      %p111 = scmp.eq.s32.totalorder %s19, 0
      %p112 = por %p110, %p111
      %p113 = scmp.ne.s32.totalorder %s102, %s105
      %p114 = scmp.eq.s32.totalorder %s24, 3
      %p115 = por %p113, %p114
      %p116 = scmp.ne.s32.totalorder %s105, %s106
      %p117 = scmp.eq.s32.totalorder %s24, 0
      %p118 = por %p116, %p117
      %p119 = scmp.ne.s32.totalorder %s105, %s106
      %p120 = scmp.eq.s32.totalorder %s25, 3
      %p121 = por %p119, %p120
      %p123 = scmp.ne.s32.totalorder %s106, %s122
      %p124 = scmp.eq.s32.totalorder %s25, 0
      %p125 = por %p123, %p124
      %s126 = ssub.s32 %s19, %s26
      %p127 = scmp.eq.s32.totalorder %s126, 0
      %s129 = sadd.s32 %s128, 1
      %s130 = scalar_select %p127, %s128, %s129
      %p133 = pneg %p127
      %p134 = scmp.eq.s32.totalorder %s19, 3
      %p135 = por %p133, %p134
      %p136 = scmp.ne.s32.totalorder %s128, %s131
      %p137 = scmp.eq.s32.totalorder %s19, 0
      %p138 = por %p136, %p137
      %p139 = scmp.ne.s32.totalorder %s128, %s131
      %p140 = scmp.eq.s32.totalorder %s24, 3
      %p141 = por %p139, %p140
      %p142 = scmp.ne.s32.totalorder %s131, %s132
      %p143 = scmp.eq.s32.totalorder %s24, 0
      %p144 = por %p142, %p143
      %p145 = scmp.ne.s32.totalorder %s131, %s132
      %p146 = scmp.eq.s32.totalorder %s25, 3
      %p147 = por %p145, %p146
      %p149 = scmp.ne.s32.totalorder %s132, %s148
      %p150 = scmp.eq.s32.totalorder %s25, 0
      %p151 = por %p149, %p150
      %p152 = scmp.le.s32.totalorder 1, %s19
      %p153 = scmp.lt.s32.totalorder %s19, 5
      %p154 = pnand %p152, %p153
      %p155 = pneg %p154
      // Predicated region
      $region9: #{tpu_custom_call.1} parent=5 // pred_check
        _
      $region10: #{tpu_custom_call.1} parent=5 // pred_check_branch
        %157 = sbr.rel (%p154) target = $region12
      $region11: #{tpu_custom_call.1} parent=5 // pred_region
        %s158 = ssub.s32 %s19, 1
        // Predicated region
        $region13: #{tpu_custom_call.1} parent=11 // pred_check
          %p159 = pneg %p92
        $region14: #{tpu_custom_call.1} parent=11 // pred_check_branch
          %161 = sbr.rel (%p159) target = $region16
        $region15: #{tpu_custom_call.1} parent=11 // pred_region
          _
        $region16: #{tpu_custom_call.1} parent=11 // pred_fallthru
          _
      $region12: #{tpu_custom_call.1} parent=5 // pred_fallthru
        _
      %p162 = scmp.lt.s32.totalorder %s19, 4
      // Predicated region
      $region17: #{tpu_custom_call.1} parent=5 // pred_check
        %p163 = pneg %p162
      $region18: #{tpu_custom_call.1} parent=5 // pred_check_branch
        %165 = sbr.rel (%p163) target = $region20
      $region19: #{tpu_custom_call.1} parent=5 // pred_region
        // Predicated region
        $region21: #{tpu_custom_call.1} parent=19 // pred_check
          %p166 = pneg %p39
        $region22: #{tpu_custom_call.1} parent=19 // pred_check_branch
          %168 = sbr.rel (%p166) target = $region24
        $region23: #{tpu_custom_call.1} parent=19 // pred_region
          %s169 = smul.u32 8, %s19
          %p170 = scmp.lt.s32.totalorder %s169, 31
          %s171 = scalar_select %p170, %s169, 31
          %s172 = smul.addr %s171, 8
          %s173 = scalar_lea.vmem %s1, %s172
          %s174 = smul.u32 8, %s19
        $region24: #{tpu_custom_call.1} parent=19 // pred_fallthru
          _
        // Predicated region
        $region25: #{tpu_custom_call.1} parent=19 // pred_check
          %p175 = pneg %p65
        $region26: #{tpu_custom_call.1} parent=19 // pred_check_branch
          %177 = sbr.rel (%p175) target = $region28
        $region27: #{tpu_custom_call.1} parent=19 // pred_region
          %s178 = smul.u32 8, %s19
          %p179 = scmp.lt.s32.totalorder %s178, 31
          %s180 = scalar_select %p179, %s178, 31
          %s181 = smul.addr %s180, 8
          %s182 = scalar_lea.vmem %s2, %s181
          %s183 = smul.u32 8, %s19
        $region28: #{tpu_custom_call.1} parent=19 // pred_fallthru
          _
      $region20: #{tpu_custom_call.1} parent=5 // pred_fallthru
        _
      %p184 = scmp.le.s32.totalorder 1, %s19
      %p185 = scmp.lt.s32.totalorder %s19, 5
      %p186 = pnand %p184, %p185
      %p187 = pneg %p186
      // Predicated region
      $region29: #{tpu_custom_call.1} parent=5 // pred_check
        _
      $region30: #{tpu_custom_call.1} parent=5 // pred_check_branch
        %189 = sbr.rel (%p186) target = $region32
      $region31: #{tpu_custom_call.1} parent=5 // pred_region
        %s190 = ssub.s32 %s19, 1
        %s191 = smul.u32 8, %s24
        %p192 = scmp.lt.s32.totalorder %s191, 31
        %s193 = scalar_select %p192, %s191, 31
        %s194 = smul.addr %s193, 8
        %s195 = scalar_lea.vmem %s1, %s194
        %p196 = pneg %p45
        %p197 = pneg %p42
        %s198 = smul.u32 8, %s24
        %p199 = scmp.lt.s32.totalorder %s198, 31
        %s200 = scalar_select %p199, %s198, 31
        %s201 = smul.addr %s200, 8
        %s202 = scalar_lea.vmem %s2, %s201
        %p203 = pneg %p71
        %p204 = pneg %p68
        %p205 = pneg %p92
        %p206 = pneg %p89
        %p207 = pneg %p118
        %p208 = pneg %p115
        %s209 = sand.u32 %s105, 1
        %s210 = scalar_lea.sflag [#allocation5], %s209
        %s211 = sand.u32 %s105, 1
        %s212 = smul.addr %s211, 8
        %s213 = scalar_lea.vmem [#allocation4], %s212
        %p214 = pneg %p144
        %p215 = pneg %p141
        %s216 = sand.u32 %s131, 1
        %s217 = scalar_lea.sflag [#allocation7], %s216
        %s218 = sand.u32 %s131, 1
        %s219 = smul.addr %s218, 8
        %s220 = scalar_lea.vmem [#allocation6], %s219
        %s221 = smul.u32 8, %s24
        %p222 = scmp.lt.s32.totalorder %s221, 31
        %s223 = scalar_select %p222, %s221, 31
        %s224 = smul.addr %s223, 8
        %s225 = scalar_lea.vmem %s1, %s224
        %s226 = smul.u32 8, %s24
        %s227 = smul.u32 8, %s24
        %p228 = scmp.lt.s32.totalorder %s227, 31
        %s229 = scalar_select %p228, %s227, 31
        %s230 = smul.addr %s229, 8
        %s231 = scalar_lea.vmem %s2, %s230
        %s232 = smul.u32 8, %s24
        %v233 = vld [vmem:[%s225] sm:$0xff]
        %v234 = vld [vmem:[%s225 + $0x8] sm:$0xff]
        %v235 = vld [vmem:[%s225 + $0x10] sm:$0xff]
        %v236 = vld [vmem:[%s225 + $0x18] sm:$0xff]
        %v237 = vld [vmem:[%s225 + $0x20] sm:$0xff]
        %v238 = vld [vmem:[%s225 + $0x28] sm:$0xff]
        %v239 = vld [vmem:[%s225 + $0x30] sm:$0xff]
        %v240 = vld [vmem:[%s225 + $0x38] sm:$0xff]
        %v241 = vld [vmem:[%s231] sm:$0xff]
        %v242 = vld [vmem:[%s231 + $0x8] sm:$0xff]
        %v243 = vld [vmem:[%s231 + $0x10] sm:$0xff]
        %v244 = vld [vmem:[%s231 + $0x18] sm:$0xff]
        %v245 = vld [vmem:[%s231 + $0x20] sm:$0xff]
        %v246 = vld [vmem:[%s231 + $0x28] sm:$0xff]
        %v247 = vld [vmem:[%s231 + $0x30] sm:$0xff]
        %v248 = vld [vmem:[%s231 + $0x38] sm:$0xff]
        %v249 = vld [vmem:[%s3] sm:$0x1]
        %v250 = vlaneseq
        %v251 = vand.u32 %v250, 127
        %252 = vset.pattern.permute.xlu0 0
        %253 = vperm.xlu0 %252, %v241
        %v254 = vpop.permute.xlu0 %253
        %255 = vset.pattern.permute.xlu0 0
        %256 = vperm.xlu0 %255, %v242
        %v257 = vpop.permute.xlu0 %256
        %258 = vset.pattern.permute.xlu0 0
        %259 = vperm.xlu0 %258, %v243
        %v260 = vpop.permute.xlu0 %259
        %261 = vset.pattern.permute.xlu0 0
        %262 = vperm.xlu0 %261, %v244
        %v263 = vpop.permute.xlu0 %262
        %264 = vset.pattern.permute.xlu0 0
        %265 = vperm.xlu0 %264, %v245
        %v266 = vpop.permute.xlu0 %265
        %267 = vset.pattern.permute.xlu0 0
        %268 = vperm.xlu0 %267, %v246
        %v269 = vpop.permute.xlu0 %268
        %270 = vset.pattern.permute.xlu0 0
        %271 = vperm.xlu0 %270, %v247
        %v272 = vpop.permute.xlu0 %271
        %273 = vset.pattern.permute.xlu0 0
        %274 = vperm.xlu0 %273, %v248
        %v275 = vpop.permute.xlu0 %274
        %vm276 = vcmp.eq.s32.totalorder %v251, %v254
        %vm277 = vcmp.eq.s32.totalorder %v251, %v257
        %vm278 = vcmp.eq.s32.totalorder %v251, %v260
        %vm279 = vcmp.eq.s32.totalorder %v251, %v263
        %vm280 = vcmp.eq.s32.totalorder %v251, %v266
        %vm281 = vcmp.eq.s32.totalorder %v251, %v269
        %vm282 = vcmp.eq.s32.totalorder %v251, %v272
        %vm283 = vcmp.eq.s32.totalorder %v251, %v275
        %284 = vmax.xlane.f32.xlu0 %v233
        %v285 = vpop.xlane.xlu0 %284
        %286 = vmax.xlane.f32.xlu0 %v234
        %v287 = vpop.xlane.xlu0 %286
        %288 = vmax.xlane.f32.xlu0 %v235
        %v289 = vpop.xlane.xlu0 %288
        %290 = vmax.xlane.f32.xlu0 %v236
        %v291 = vpop.xlane.xlu0 %290
        %292 = vmax.xlane.f32.xlu0 %v237
        %v293 = vpop.xlane.xlu0 %292
        %294 = vmax.xlane.f32.xlu0 %v238
        %v295 = vpop.xlane.xlu0 %294
        %296 = vmax.xlane.f32.xlu0 %v239
        %v297 = vpop.xlane.xlu0 %296
        %298 = vmax.xlane.f32.xlu0 %v240
        %v299 = vpop.xlane.xlu0 %298
        %v300 = vsub.f32 %v233, %v285
        %v301 = vsub.f32 %v234, %v287
        %v302 = vsub.f32 %v235, %v289
        %v303 = vsub.f32 %v236, %v291
        %v304 = vsub.f32 %v237, %v293
        %v305 = vsub.f32 %v238, %v295
        %v306 = vsub.f32 %v239, %v297
        %v307 = vsub.f32 %v240, %v299
        %v308 = vmul.f32 %v300, 1.442695
        %v309 = vpow.pop %v308
        %v310 = vmul.f32 %v301, 1.442695
        %v311 = vpow.pop %v310
        %v312 = vmul.f32 %v302, 1.442695
        %v313 = vpow.pop %v312
        %v314 = vmul.f32 %v303, 1.442695
        %v315 = vpow.pop %v314
        %v316 = vmul.f32 %v304, 1.442695
        %v317 = vpow.pop %v316
        %v318 = vmul.f32 %v305, 1.442695
        %v319 = vpow.pop %v318
        %v320 = vmul.f32 %v306, 1.442695
        %v321 = vpow.pop %v320
        %v322 = vmul.f32 %v307, 1.442695
        %v323 = vpow.pop %v322
        %324 = vadd.xlane.f32.xlu0 %v309
        %v325 = vpop.xlane.xlu0 %324
        %326 = vadd.xlane.f32.xlu0 %v311
        %v327 = vpop.xlane.xlu0 %326
        %328 = vadd.xlane.f32.xlu0 %v313
        %v329 = vpop.xlane.xlu0 %328
        %330 = vadd.xlane.f32.xlu0 %v315
        %v331 = vpop.xlane.xlu0 %330
        %332 = vadd.xlane.f32.xlu0 %v317
        %v333 = vpop.xlane.xlu0 %332
        %334 = vadd.xlane.f32.xlu0 %v319
        %v335 = vpop.xlane.xlu0 %334
        %336 = vadd.xlane.f32.xlu0 %v321
        %v337 = vpop.xlane.xlu0 %336
        %338 = vadd.xlane.f32.xlu0 %v323
        %v339 = vpop.xlane.xlu0 %338
        %v340 = vsel %vm276, %v233, 0.0
        %v341 = vsel %vm277, %v234, 0.0
        %v342 = vsel %vm278, %v235, 0.0
        %v343 = vsel %vm279, %v236, 0.0
        %v344 = vsel %vm280, %v237, 0.0
        %v345 = vsel %vm281, %v238, 0.0
        %v346 = vsel %vm282, %v239, 0.0
        %v347 = vsel %vm283, %v240, 0.0
        %348 = vadd.xlane.f32.xlu0 %v340
        %v349 = vpop.xlane.xlu0 %348
        %350 = vadd.xlane.f32.xlu0 %v341
        %v351 = vpop.xlane.xlu0 %350
        %352 = vadd.xlane.f32.xlu0 %v342
        %v353 = vpop.xlane.xlu0 %352
        %354 = vadd.xlane.f32.xlu0 %v343
        %v355 = vpop.xlane.xlu0 %354
        %356 = vadd.xlane.f32.xlu0 %v344
        %v357 = vpop.xlane.xlu0 %356
        %358 = vadd.xlane.f32.xlu0 %v345
        %v359 = vpop.xlane.xlu0 %358
        %360 = vadd.xlane.f32.xlu0 %v346
        %v361 = vpop.xlane.xlu0 %360
        %362 = vadd.xlane.f32.xlu0 %v347
        %v363 = vpop.xlane.xlu0 %362
        %v365 = vlaneseq
        %v366 = vshrl.u32 %v365, 7
        %v367 = vsub.s32 0, %v366
        %v368 = vrot.slane %v249, %v367
        %v370 = vsel %vm276, %v368, 0.0
        %v371 = vsel %vm277, %v368, 0.0
        %v372 = vsel %vm278, %v368, 0.0
        %v373 = vsel %vm279, %v368, 0.0
        %v374 = vsel %vm280, %v368, 0.0
        %v375 = vsel %vm281, %v368, 0.0
        %v376 = vsel %vm282, %v368, 0.0
        %v377 = vsel %vm283, %v368, 0.0
        %378 = vadd.xlane.f32.xlu0 %v370
        %v379 = vpop.xlane.xlu0 %378
        %380 = vadd.xlane.f32.xlu0 %v371
        %v381 = vpop.xlane.xlu0 %380
        %382 = vadd.xlane.f32.xlu0 %v372
        %v383 = vpop.xlane.xlu0 %382
        %384 = vadd.xlane.f32.xlu0 %v373
        %v385 = vpop.xlane.xlu0 %384
        %386 = vadd.xlane.f32.xlu0 %v374
        %v387 = vpop.xlane.xlu0 %386
        %388 = vadd.xlane.f32.xlu0 %v375
        %v389 = vpop.xlane.xlu0 %388
        %390 = vadd.xlane.f32.xlu0 %v376
        %v391 = vpop.xlane.xlu0 %390
        %392 = vadd.xlane.f32.xlu0 %v377
        %v393 = vpop.xlane.xlu0 %392
        %v394 = vsub.f32 %v349, %v285
        %v395 = vsub.f32 %v351, %v287
        %v396 = vsub.f32 %v353, %v289
        %v397 = vsub.f32 %v355, %v291
        %v398 = vsub.f32 %v357, %v293
        %v399 = vsub.f32 %v359, %v295
        %v400 = vsub.f32 %v361, %v297
        %v401 = vsub.f32 %v363, %v299
        %v402 = vlog2.pop %v325
        %v403 = vmul.f32 %v402, 0.6931472
        %v404 = vlog2.pop %v327
        %v405 = vmul.f32 %v404, 0.6931472
        %v406 = vlog2.pop %v329
        %v407 = vmul.f32 %v406, 0.6931472
        %v408 = vlog2.pop %v331
        %v409 = vmul.f32 %v408, 0.6931472
        %v410 = vlog2.pop %v333
        %v411 = vmul.f32 %v410, 0.6931472
        %v412 = vlog2.pop %v335
        %v413 = vmul.f32 %v412, 0.6931472
        %v414 = vlog2.pop %v337
        %v415 = vmul.f32 %v414, 0.6931472
        %v416 = vlog2.pop %v339
        %v417 = vmul.f32 %v416, 0.6931472
        %v418 = vsub.f32 %v394, %v403
        %v419 = vsub.f32 %v395, %v405
        %v420 = vsub.f32 %v396, %v407
        %v421 = vsub.f32 %v397, %v409
        %v422 = vsub.f32 %v398, %v411
        %v423 = vsub.f32 %v399, %v413
        %v424 = vsub.f32 %v400, %v415
        %v425 = vsub.f32 %v401, %v417
        %v426 = vmul.f32 %v418, 1.442695
        %v427 = vpow.pop %v426
        %v428 = vmul.f32 %v419, 1.442695
        %v429 = vpow.pop %v428
        %v430 = vmul.f32 %v420, 1.442695
        %v431 = vpow.pop %v430
        %v432 = vmul.f32 %v421, 1.442695
        %v433 = vpow.pop %v432
        %v434 = vmul.f32 %v422, 1.442695
        %v435 = vpow.pop %v434
        %v436 = vmul.f32 %v423, 1.442695
        %v437 = vpow.pop %v436
        %v438 = vmul.f32 %v424, 1.442695
        %v439 = vpow.pop %v438
        %v440 = vmul.f32 %v425, 1.442695
        %v441 = vpow.pop %v440
        %v442 = vsub.f32 1.0, %v427
        %v443 = vsub.f32 1.0, %v429
        %v444 = vsub.f32 1.0, %v431
        %v445 = vsub.f32 1.0, %v433
        %v446 = vsub.f32 1.0, %v435
        %v447 = vsub.f32 1.0, %v437
        %v448 = vsub.f32 1.0, %v439
        %v449 = vsub.f32 1.0, %v441
        %v450 = vmul.f32 %v442, %v442
        %v451 = vmul.f32 %v443, %v443
        %v452 = vmul.f32 %v444, %v444
        %v453 = vmul.f32 %v445, %v445
        %v454 = vmul.f32 %v446, %v446
        %v455 = vmul.f32 %v447, %v447
        %v456 = vmul.f32 %v448, %v448
        %v457 = vmul.f32 %v449, %v449
        %v458 = vsub.f32 0.0, %v450
        %v459 = vsub.f32 0.0, %v451
        %v460 = vsub.f32 0.0, %v452
        %v461 = vsub.f32 0.0, %v453
        %v462 = vsub.f32 0.0, %v454
        %v463 = vsub.f32 0.0, %v455
        %v464 = vsub.f32 0.0, %v456
        %v465 = vsub.f32 0.0, %v457
        %v466 = vmul.f32 %v458, %v418
        %v467 = vmul.f32 %v459, %v419
        %v468 = vmul.f32 %v460, %v420
        %v469 = vmul.f32 %v461, %v421
        %v470 = vmul.f32 %v462, %v422
        %v471 = vmul.f32 %v463, %v423
        %v472 = vmul.f32 %v464, %v424
        %v473 = vmul.f32 %v465, %v425
        %s474 = smul.u32 %s24, 64
        %v475 = vlaneseq
        %v476 = vshrl.u32 %v475, 7
        %v477 = vadd.s32 %v476, 8
        %v478 = vadd.s32 %v476, 16
        %v479 = vadd.s32 %v476, 24
        %v480 = vadd.s32 %v476, 32
        %v481 = vadd.s32 %v476, 40
        %v482 = vadd.s32 %v476, 48
        %v483 = vadd.s32 %v476, 56
        %v484 = vstv %s474
        %v485 = vadd.s32 %v484, %v476
        %v486 = vadd.s32 %v484, %v477
        %v487 = vadd.s32 %v484, %v478
        %v488 = vadd.s32 %v484, %v479
        %v489 = vadd.s32 %v484, %v480
        %v490 = vadd.s32 %v484, %v481
        %v491 = vadd.s32 %v484, %v482
        %v492 = vadd.s32 %v484, %v483
        %s493 = sld [smem:[#allocation3]]
        %v494 = vstv %s493
        %vm495 = vcmp.lt.s32.totalorder %v485, %v494
        %vm496 = vcmp.lt.s32.totalorder %v486, %v494
        %vm497 = vcmp.lt.s32.totalorder %v487, %v494
        %vm498 = vcmp.lt.s32.totalorder %v488, %v494
        %vm499 = vcmp.lt.s32.totalorder %v489, %v494
        %vm500 = vcmp.lt.s32.totalorder %v490, %v494
        %vm501 = vcmp.lt.s32.totalorder %v491, %v494
        %vm502 = vcmp.lt.s32.totalorder %v492, %v494
        %v503 = vsel %vm495, 1, 0
        %v504 = vsel %vm496, 1, 0
        %v505 = vsel %vm497, 1, 0
        %v506 = vsel %vm498, 1, 0
        %v507 = vsel %vm499, 1, 0
        %v508 = vsel %vm500, 1, 0
        %v509 = vsel %vm501, 1, 0
        %v510 = vsel %vm502, 1, 0
        %v511 = vcvt.s32.f32 %v503
        %v512 = vcvt.s32.f32 %v504
        %v513 = vcvt.s32.f32 %v505
        %v514 = vcvt.s32.f32 %v506
        %v515 = vcvt.s32.f32 %v507
        %v516 = vcvt.s32.f32 %v508
        %v517 = vcvt.s32.f32 %v509
        %v518 = vcvt.s32.f32 %v510
        %v519 = vmul.f32 %v379, %v511
        %v520 = vmul.f32 %v381, %v512
        %v521 = vmul.f32 %v383, %v513
        %v522 = vmul.f32 %v385, %v514
        %v523 = vmul.f32 %v387, %v515
        %v524 = vmul.f32 %v389, %v516
        %v525 = vmul.f32 %v391, %v517
        %v526 = vmul.f32 %v393, %v518
        %vm527 = vcmask 7168
        %v528 = vsel %vm527, %v519, 0.0
        %v529 = vsel %vm527, %v520, 0.0
        %v530 = vadd.f32 %v528, %v529
        %v531 = vsel %vm527, %v521, 0.0
        %v532 = vadd.f32 %v530, %v531
        %v533 = vsel %vm527, %v522, 0.0
        %v534 = vadd.f32 %v532, %v533
        %v535 = vsel %vm527, %v523, 0.0
        %v536 = vadd.f32 %v534, %v535
        %v537 = vsel %vm527, %v524, 0.0
        %v538 = vadd.f32 %v536, %v537
        %v539 = vsel %vm527, %v525, 0.0
        %v540 = vadd.f32 %v538, %v539
        %v541 = vsel %vm527, %v526, 0.0
        %v542 = vadd.f32 %v540, %v541
        %543 = vadd.xlane.f32.xlu0 %v542
        %v544 = vpop.xlane.xlu0 %543
        %v545 = vrot.slane %v544, 4
        %v546 = vadd.f32 %v544, %v545
        %v547 = vrot.slane %v546, 2
        %v548 = vadd.f32 %v546, %v547
        %v549 = vrot.slane %v548, 1
        %v550 = vadd.f32 %v548, %v549
        %s551 = vtos %v550
        %v552 = vmul.f32 %v466, %v511
        %v553 = vmul.f32 %v467, %v512
        %v554 = vmul.f32 %v468, %v513
        %v555 = vmul.f32 %v469, %v514
        %v556 = vmul.f32 %v470, %v515
        %v557 = vmul.f32 %v471, %v516
        %v558 = vmul.f32 %v472, %v517
        %v559 = vmul.f32 %v473, %v518
        %v560 = vsel %vm527, %v552, 0.0
        %v561 = vsel %vm527, %v553, 0.0
        %v562 = vadd.f32 %v560, %v561
        %v563 = vsel %vm527, %v554, 0.0
        %v564 = vadd.f32 %v562, %v563
        %v565 = vsel %vm527, %v555, 0.0
        %v566 = vadd.f32 %v564, %v565
        %v567 = vsel %vm527, %v556, 0.0
        %v568 = vadd.f32 %v566, %v567
        %v569 = vsel %vm527, %v557, 0.0
        %v570 = vadd.f32 %v568, %v569
        %v571 = vsel %vm527, %v558, 0.0
        %v572 = vadd.f32 %v570, %v571
        %v573 = vsel %vm527, %v559, 0.0
        %v574 = vadd.f32 %v572, %v573
        %575 = vadd.xlane.f32.xlu0 %v574
        %v576 = vpop.xlane.xlu0 %575
        %v577 = vrot.slane %v576, 4
        %v578 = vadd.f32 %v576, %v577
        %v579 = vrot.slane %v578, 2
        %v580 = vadd.f32 %v578, %v579
        %v581 = vrot.slane %v580, 1
        %v582 = vadd.f32 %v580, %v581
        %s583 = vtos %v582
        %v584 = vstv %s551
        %585 = vst [vmem:[%s213] sm:$0xff] %v584
        %v586 = vstv %s583
        %587 = vst [vmem:[%s220] sm:$0xff] %v586
        %s588 = sand.u32 %s105, 1
        %s589 = scalar_lea.sflag [#allocation5], %s588
        %s590 = sand.u32 %s105, 1
        %s591 = smul.addr %s590, 8
        %s592 = scalar_lea.vmem [#allocation4], %s591
        %s593 = sand.u32 %s131, 1
        %s594 = scalar_lea.sflag [#allocation7], %s593
        %s595 = sand.u32 %s131, 1
        %s596 = smul.addr %s595, 8
        %s597 = scalar_lea.vmem [#allocation6], %s596
        // Predicated region
        $region33: #{tpu_custom_call.1} parent=31 // pred_check
          %p598 = pneg %p115
        $region34: #{tpu_custom_call.1} parent=31 // pred_check_branch
          %600 = sbr.rel (%p598) target = $region36
        $region35: #{tpu_custom_call.1} parent=31 // pred_region
          %s602 = ssub.s32 128, 128
          %603 = vsyncadd %s589, %s602
          %s604 = smul.addr %s24, 128
          %s605 = scalar_lea.hbm %s4, %s604
          %s607 = sshll.u32 %s592, 4
          %s608 = int_to_ptr.vmem [resolvable:$true] %s607
          %610 = dma.vmem_to_hbm [thread:$0]  %s608, 128, %s605, %s589
        $region36: #{tpu_custom_call.1} parent=31 // pred_fallthru
          _
        // Predicated region
        $region37: #{tpu_custom_call.1} parent=31 // pred_check
          %p611 = pneg %p141
        $region38: #{tpu_custom_call.1} parent=31 // pred_check_branch
          %613 = sbr.rel (%p611) target = $region40
        $region39: #{tpu_custom_call.1} parent=31 // pred_region
          %s615 = ssub.s32 128, 128
          %616 = vsyncadd %s594, %s615
          %s617 = smul.addr %s24, 128
          %s618 = scalar_lea.hbm %s5, %s617
          %s620 = sshll.u32 %s597, 4
          %s621 = int_to_ptr.vmem [resolvable:$true] %s620
          %623 = dma.vmem_to_hbm [thread:$0]  %s621, 128, %s618, %s594
        $region40: #{tpu_custom_call.1} parent=31 // pred_fallthru
          _
      $region32: #{tpu_custom_call.1} parent=5 // pred_fallthru
        _
      %p624 = scmp.le.s32.totalorder 2, %s19
      // Predicated region
      $region41: #{tpu_custom_call.1} parent=5 // pred_check
        %p625 = pneg %p624
      $region42: #{tpu_custom_call.1} parent=5 // pred_check_branch
        %627 = sbr.rel (%p625) target = $region44
      $region43: #{tpu_custom_call.1} parent=5 // pred_region
        %s628 = ssub.s32 %s19, 2
        // Predicated region
        $region45: #{tpu_custom_call.1} parent=43 // pred_check
          %p629 = pneg %p121
        $region46: #{tpu_custom_call.1} parent=43 // pred_check_branch
          %631 = sbr.rel (%p629) target = $region48
        $region47: #{tpu_custom_call.1} parent=43 // pred_region
          %s632 = sand.u32 %s106, 1
          %s633 = scalar_lea.sflag [#allocation5], %s632
          %s634 = sand.u32 %s106, 1
          %s635 = smul.addr %s634, 8
          %s636 = scalar_lea.vmem [#allocation4], %s635
          %637 = dma.done %s633, 128
        $region48: #{tpu_custom_call.1} parent=43 // pred_fallthru
          _
        // Predicated region
        $region49: #{tpu_custom_call.1} parent=43 // pred_check
          %p638 = pneg %p147
        $region50: #{tpu_custom_call.1} parent=43 // pred_check_branch
          %640 = sbr.rel (%p638) target = $region52
        $region51: #{tpu_custom_call.1} parent=43 // pred_region
          %s641 = sand.u32 %s132, 1
          %s642 = scalar_lea.sflag [#allocation7], %s641
          %s643 = sand.u32 %s132, 1
          %s644 = smul.addr %s643, 8
          %s645 = scalar_lea.vmem [#allocation6], %s644
          %646 = dma.done %s642, 128
        $region52: #{tpu_custom_call.1} parent=43 // pred_fallthru
          _
      $region44: #{tpu_custom_call.1} parent=5 // pred_fallthru
        _
    $region6: #{tpu_custom_call.1} parent=1 // loop_footer
      %s23 = sadd.s32 1, %s19
    $region7: #{tpu_custom_call.1} parent=1 // loop_footer_branch
      %18 = sbr.rel target = $region3
    $region8: #{tpu_custom_call.1} parent=1 // loop_exit
      _
    %647 = vsyncpa [#allocation5], 1
    %s648 = scalar_lea.sflag [#allocation5], 1
    %649 = vsyncpa %s648, 1
    %650 = vsyncpa [#allocation7], 1
    %s651 = scalar_lea.sflag [#allocation7], 1
    %652 = vsyncpa %s651, 1

</llo_original>
